<compile_context>
chip_gen: v6e
topology: v6e:2x2x1
jax: 0.10.0
libtpu: 0.0.40
codegen_flags: <defaults>
</compile_context>

<pallas_src>
import functools
import math

import jax
import jax.numpy as jnp
from jax.experimental import pallas as pl
from jax.experimental.pallas import tpu as pltpu


# ----------------------------------------------------------------------------
# Pallas kernel: fused sinusoid + 2-layer MLP (Linear -> SiLU -> Linear)
# ----------------------------------------------------------------------------

def _time_embedding_kernel(t_ref, freqs_ref, w1c_ref, w1s_ref, b1_ref,
                           w2_ref, b2_ref, o_ref):
    # Sinusoidal embedding: x = timestep[:, None] * freqs[None, :]
    x = t_ref[...] * freqs_ref[...]                      # [B, half] f32
    c = jnp.cos(x).astype(jnp.bfloat16)                  # cast only the MXU feeds
    s = jnp.sin(x).astype(jnp.bfloat16)

    # cat([cos, sin], -1) @ W1  ==  cos @ W1[:half] + sin @ W1[half:]
    h = (jnp.dot(c, w1c_ref[...], preferred_element_type=jnp.float32)
         + jnp.dot(s, w1s_ref[...], preferred_element_type=jnp.float32)
         + b1_ref[...])                                   # [B, 4D] f32

    h = h * jax.nn.sigmoid(h)                             # SiLU, f32 (v5e-safe)

    o_ref[...] = (jnp.dot(h.astype(jnp.bfloat16), w2_ref[...],
                          preferred_element_type=jnp.float32)
                  + b2_ref[...])                          # [B, 4D] f32


# ----------------------------------------------------------------------------
# Parameters + forward wrapper
# ----------------------------------------------------------------------------

def init_time_embedding(key, t_embed_dim):
    """Weights stored pre-transposed [in, out], bf16 (MXU feed format);
    first-layer weight pre-split into cos/sin halves; biases kept f32."""
    half = t_embed_dim // 2
    hidden = 4 * t_embed_dim
    k1, k2, k3, k4 = jax.random.split(key, 4)
    lim1 = 1.0 / math.sqrt(t_embed_dim)
    lim2 = 1.0 / math.sqrt(hidden)
    w1 = jax.random.uniform(k1, (t_embed_dim, hidden), jnp.float32, -lim1, lim1)
    b1 = jax.random.uniform(k2, (1, hidden), jnp.float32, -lim1, lim1)
    w2 = jax.random.uniform(k3, (hidden, hidden), jnp.float32, -lim2, lim2)
    b2 = jax.random.uniform(k4, (1, hidden), jnp.float32, -lim2, lim2)
    w1 = w1.astype(jnp.bfloat16)
    return {'w1_cos': w1[:half, :], 'w1_sin': w1[half:, :], 'b1': b1,
            'w2': w2.astype(jnp.bfloat16), 'b2': b2}


@functools.partial(jax.jit, static_argnames=("t_embed_dim",))
def time_embedding_fwd(params, timestep, t_embed_dim):
    B = timestep.shape[0]
    half = t_embed_dim // 2
    hidden = 4 * t_embed_dim

    # Compile-time constant frequency table (folded by XLA under jit).
    freqs = jnp.power(
        10000.0, -jnp.arange(half, dtype=jnp.float32) / half).reshape(1, half)
    t = timestep.astype(jnp.float32).reshape(B, 1)

    vmem = pl.BlockSpec(memory_space=pltpu.MemorySpace.VMEM)  # full-extent blocks
    return pl.pallas_call(
        _time_embedding_kernel,
        out_shape=jax.ShapeDtypeStruct((B, hidden), jnp.float32),
        in_specs=[vmem] * 7,
        out_specs=vmem,
    )(t, freqs, params['w1_cos'], params['w1_sin'], params['b1'],
      params['w2'], params['b2'])


def time_embedding_ref(params, timestep, t_embed_dim):
    """Pure-jnp reference mirroring the kernel's bf16 cast points."""
    half = t_embed_dim // 2
    freqs = jnp.power(10000.0, -jnp.arange(half, dtype=jnp.float32) / half)
    x = timestep.astype(jnp.float32)[:, None] * freqs[None, :]
    c = jnp.cos(x).astype(jnp.bfloat16)
    s = jnp.sin(x).astype(jnp.bfloat16)
    h = (jnp.dot(c, params['w1_cos'], preferred_element_type=jnp.float32)
         + jnp.dot(s, params['w1_sin'], preferred_element_type=jnp.float32)
         + params['b1'])
    h = h * jax.nn.sigmoid(h)
    return (jnp.dot(h.astype(jnp.bfloat16), params['w2'],
                    preferred_element_type=jnp.float32) + params['b2'])


# ----------------------------------------------------------------------------
# Driver
# ----------------------------------------------------------------------------

if __name__ == "__main__":
    T_EMBED_DIM = 32          # scaled-down (PyTorch default is 320); hidden = 128
    B = 2

    key = jax.random.PRNGKey(0)
    k_params, k_t = jax.random.split(key)
    params = init_time_embedding(k_params, T_EMBED_DIM)
    timestep = jax.random.randint(k_t, (B,), 0, 1000, dtype=jnp.int32)

    out = time_embedding_fwd(params, timestep, T_EMBED_DIM)
    out = jax.block_until_ready(out)

    assert out.shape == (B, 4 * T_EMBED_DIM), out.shape
    assert bool(jnp.all(jnp.isfinite(out)))

    ref = time_embedding_ref(params, timestep, T_EMBED_DIM)
    assert bool(jnp.allclose(out, ref, atol=1e-2, rtol=1e-2)), (
        float(jnp.max(jnp.abs(out - ref))))

    print("KERNEL_OK")
</pallas_src>

<mosaic_0001>
module attributes {stable_mosaic.version = 11 : i64} {
  func.func @_time_embedding_kernel(%arg0: memref<2x1xf32, #tpu.memory_space<vmem>>, %arg1: memref<1x16xf32, #tpu.memory_space<vmem>>, %arg2: memref<16x128xbf16, #tpu.memory_space<vmem>>, %arg3: memref<16x128xbf16, #tpu.memory_space<vmem>>, %arg4: memref<1x128xf32, #tpu.memory_space<vmem>>, %arg5: memref<128x128xbf16, #tpu.memory_space<vmem>>, %arg6: memref<1x128xf32, #tpu.memory_space<vmem>>, %arg7: memref<2x128xf32, #tpu.memory_space<vmem>>) attributes {dimension_semantics = [], scalar_prefetch = 0 : i64, scratch_operands = 0 : i64, tpu.core_type = #tpu.core_type<tc>} {
    %c0 = arith.constant 0 : index
    %c0_0 = arith.constant 0 : index
    %0 = vector.load %arg0[%c0, %c0_0] : memref<2x1xf32, #tpu.memory_space<vmem>>, vector<2x1xf32>
    %c0_1 = arith.constant 0 : index
    %c0_2 = arith.constant 0 : index
    %1 = vector.load %arg1[%c0_1, %c0_2] : memref<1x16xf32, #tpu.memory_space<vmem>>, vector<1x16xf32>
    %2 = vector.broadcast %0 : vector<2x1xf32> to vector<2x16xf32>
    %3 = vector.broadcast %1 : vector<1x16xf32> to vector<2x16xf32>
    %4 = arith.mulf %2, %3 : vector<2x16xf32>
    %5 = math.cos %4 : vector<2x16xf32>
    %6 = arith.truncf %5 : vector<2x16xf32> to vector<2x16xbf16>
    %7 = math.sin %4 : vector<2x16xf32>
    %8 = arith.truncf %7 : vector<2x16xf32> to vector<2x16xbf16>
    %c0_3 = arith.constant 0 : index
    %c0_4 = arith.constant 0 : index
    %9 = vector.load %arg2[%c0_3, %c0_4] : memref<16x128xbf16, #tpu.memory_space<vmem>>, vector<16x128xbf16>
    %cst = arith.constant dense<0.000000e+00> : vector<2x128xf32>
    %10 = tpu.matmul %6, %9, %cst {dimension_numbers = #tpu.dot_dimension_numbers<[1], [0], [0], [1], [0, 0, 1, 1], [], []>} : vector<2x16xbf16>, vector<16x128xbf16>, vector<2x128xf32> -> vector<2x128xf32>
    %c0_5 = arith.constant 0 : index
    %c0_6 = arith.constant 0 : index
    %11 = vector.load %arg3[%c0_5, %c0_6] : memref<16x128xbf16, #tpu.memory_space<vmem>>, vector<16x128xbf16>
    %cst_7 = arith.constant dense<0.000000e+00> : vector<2x128xf32>
    %12 = tpu.matmul %8, %11, %cst_7 {dimension_numbers = #tpu.dot_dimension_numbers<[1], [0], [0], [1], [0, 0, 1, 1], [], []>} : vector<2x16xbf16>, vector<16x128xbf16>, vector<2x128xf32> -> vector<2x128xf32>
    %13 = arith.addf %10, %12 : vector<2x128xf32>
    %c0_8 = arith.constant 0 : index
    %c0_9 = arith.constant 0 : index
    %14 = vector.load %arg4[%c0_8, %c0_9] : memref<1x128xf32, #tpu.memory_space<vmem>>, vector<1x128xf32>
    %15 = vector.broadcast %14 : vector<1x128xf32> to vector<2x128xf32>
    %16 = arith.addf %13, %15 : vector<2x128xf32>
    %17 = arith.negf %16 : vector<2x128xf32>
    %18 = math.exp %17 : vector<2x128xf32>
    %cst_10 = arith.constant 1.000000e+00 : f32
    %19 = vector.broadcast %cst_10 : f32 to vector<2x128xf32>
    %20 = arith.addf %19, %18 : vector<2x128xf32>
    %21 = arith.divf %19, %20 : vector<2x128xf32>
    %22 = arith.mulf %16, %21 : vector<2x128xf32>
    %23 = arith.truncf %22 : vector<2x128xf32> to vector<2x128xbf16>
    %c0_11 = arith.constant 0 : index
    %c0_12 = arith.constant 0 : index
    %24 = vector.load %arg5[%c0_11, %c0_12] : memref<128x128xbf16, #tpu.memory_space<vmem>>, vector<128x128xbf16>
    %cst_13 = arith.constant dense<0.000000e+00> : vector<2x128xf32>
    %25 = tpu.matmul %23, %24, %cst_13 {dimension_numbers = #tpu.dot_dimension_numbers<[1], [0], [0], [1], [0, 0, 1, 1], [], []>} : vector<2x128xbf16>, vector<128x128xbf16>, vector<2x128xf32> -> vector<2x128xf32>
    %c0_14 = arith.constant 0 : index
    %c0_15 = arith.constant 0 : index
    %26 = vector.load %arg6[%c0_14, %c0_15] : memref<1x128xf32, #tpu.memory_space<vmem>>, vector<1x128xf32>
    %27 = vector.broadcast %26 : vector<1x128xf32> to vector<2x128xf32>
    %28 = arith.addf %25, %27 : vector<2x128xf32>
    %c0_16 = arith.constant 0 : index
    %c0_17 = arith.constant 0 : index
    %29 = vector.load %arg7[%c0_16, %c0_17] : memref<2x128xf32, #tpu.memory_space<vmem>>, vector<2x128xf32>
    tpu.vector_store %arg7[%c0_16, %c0_17], %28 {strides = array<i32>} : memref<2x128xf32, #tpu.memory_space<vmem>>, vector<2x128xf32>,
    return
  }
}

</mosaic_0001>

<llo_original>
// kernel: time_embedding_fwd.1
$region0: #{time_embedding_fwd.1}
  #allocation0 [shape = 'u32[]', space=smem, size = 0x4, offset = 0x4, fixed_abs, tag = 'smem constant byte address 0x4 - core index']
  #allocation1 [shape = 'u32[144,128]{1,0:T(1,128)}', space=vmem, size = 0x12000, scoped, tag = 'internal scratch']
  %s0 = inlined_call_operand.vmem [shape: f32[2,1], index: 0, kind: input, shape index: {}]
  %s1 = inlined_call_operand.vmem [shape: f32[1,16], index: 1, kind: input, shape index: {}]
  %s2 = inlined_call_operand.vmem [shape: bf16[16,128], index: 2, kind: input, shape index: {}]
  %s3 = inlined_call_operand.hbm [shape: bf16[16,128], index: 3, kind: input, shape index: {}]
  %s4 = inlined_call_operand.vmem [shape: f32[1,128], index: 4, kind: input, shape index: {}]
  %s5 = inlined_call_operand.hbm [shape: bf16[128,128], index: 5, kind: input, shape index: {}]
  %s6 = inlined_call_operand.vmem [shape: f32[1,128], index: 6, kind: input, shape index: {}]
  %s7 = inlined_call_operand.hbm [shape: f32[2,128], index: 7, kind: output, shape index: {}]
  %s8 = sld [smem:[#allocation0]]
  $region46: #{time_embedding_fwd.1} parent=0
    _
  %s10 = ssub.s32 1, %s8
  %s11 = scalar_select 0, %s10, %s8
  $region1: #{time_embedding_fwd.1} parent=0
    #allocation2 [shape = 'u8[4096]{0}', space=vmem, size = 0x1000, scoped, tag = 'input window, operand 3, single buffered']
    #allocation3 [shape = 's32[1]{0}', space=sflag, size = 0x4, scoped, tag = 'scoped memory for time_embedding_fwd.1']
    #allocation4 [shape = 's32[1]{0}', space=sflag, size = 0x4, scoped, tag = 'scoped memory for time_embedding_fwd.1']
    #allocation5 [shape = 'u8[32768]{0}', space=vmem, size = 0x8000, scoped, tag = 'input window, operand 5, single buffered']
    #allocation6 [shape = 's32[1]{0}', space=sflag, size = 0x4, scoped, tag = 'scoped memory for time_embedding_fwd.1']
    #allocation7 [shape = 'u8[1024]{0}', space=vmem, size = 0x400, scoped, tag = 'output window, operand 0, single buffered']
    %12 = vsyncpa [#allocation3], 0
    %13 = vsyncpa [#allocation6], 0
    %14 = vsyncpa [#allocation4], 0
    // Predicated region
    $region2: #{time_embedding_fwd.1} parent=1 // pred_check
      _
    $region3: #{time_embedding_fwd.1} parent=1 // pred_check_branch
      %16 = sbr.rel (0) target = $region5
    $region4: #{time_embedding_fwd.1} parent=1 // pred_region
      _
    $region5: #{time_embedding_fwd.1} parent=1 // pred_fallthru
      _
    // Predicated region
    $region6: #{time_embedding_fwd.1} parent=1 // pred_check
      _
    $region7: #{time_embedding_fwd.1} parent=1 // pred_check_branch
      %18 = sbr.rel (0) target = $region9
    $region8: #{time_embedding_fwd.1} parent=1 // pred_region
      _
    $region9: #{time_embedding_fwd.1} parent=1 // pred_fallthru
      _
    // Predicated region
    $region10: #{time_embedding_fwd.1} parent=1 // pred_check
      _
    $region11: #{time_embedding_fwd.1} parent=1 // pred_check_branch
      %20 = sbr.rel (0) target = $region13
    $region12: #{time_embedding_fwd.1} parent=1 // pred_region
      _
    $region13: #{time_embedding_fwd.1} parent=1 // pred_fallthru
      _
    // Predicated region
    $region14: #{time_embedding_fwd.1} parent=1 // pred_check
      _
    $region15: #{time_embedding_fwd.1} parent=1 // pred_check_branch
      %22 = sbr.rel (0) target = $region17
    $region16: #{time_embedding_fwd.1} parent=1 // pred_region
      %s24 = ssub.s32 128, 128
      %25 = vsyncadd [#allocation3], %s24
      %s26 = sshll.u32 [#allocation2], 4
      %s27 = int_to_ptr.vmem [resolvable:$true] %s26
      %32 = dma.hbm_to_vmem [thread:$0]  %s3, 128, %s27, [#allocation3], 64, 64, 4
    $region17: #{time_embedding_fwd.1} parent=1 // pred_fallthru
      _
    // Predicated region
    $region18: #{time_embedding_fwd.1} parent=1 // pred_check
      _
    $region19: #{time_embedding_fwd.1} parent=1 // pred_check_branch
      %34 = sbr.rel (0) target = $region21
    $region20: #{time_embedding_fwd.1} parent=1 // pred_region
      _
    $region21: #{time_embedding_fwd.1} parent=1 // pred_fallthru
      _
    // Predicated region
    $region22: #{time_embedding_fwd.1} parent=1 // pred_check
      _
    $region23: #{time_embedding_fwd.1} parent=1 // pred_check_branch
      %36 = sbr.rel (0) target = $region25
    $region24: #{time_embedding_fwd.1} parent=1 // pred_region
      %s38 = ssub.s32 1024, 1024
      %39 = vsyncadd [#allocation6], %s38
      %s40 = sshll.u32 [#allocation5], 4
      %s41 = int_to_ptr.vmem [resolvable:$true] %s40
      %46 = dma.hbm_to_vmem [thread:$0]  %s5, 1024, %s41, [#allocation6], 64, 64, 4
    $region25: #{time_embedding_fwd.1} parent=1 // pred_fallthru
      _
    // Predicated region
    $region26: #{time_embedding_fwd.1} parent=1 // pred_check
      _
    $region27: #{time_embedding_fwd.1} parent=1 // pred_check_branch
      %48 = sbr.rel (0) target = $region29
    $region28: #{time_embedding_fwd.1} parent=1 // pred_region
      _
    $region29: #{time_embedding_fwd.1} parent=1 // pred_fallthru
      _
    // Predicated region
    $region30: #{time_embedding_fwd.1} parent=1 // pred_check
      _
    $region31: #{time_embedding_fwd.1} parent=1 // pred_check_branch
      %50 = sbr.rel (0) target = $region33
    $region32: #{time_embedding_fwd.1} parent=1 // pred_region
      %51 = dma.done [#allocation3], 128
    $region33: #{time_embedding_fwd.1} parent=1 // pred_fallthru
      _
    // Predicated region
    $region34: #{time_embedding_fwd.1} parent=1 // pred_check
      _
    $region35: #{time_embedding_fwd.1} parent=1 // pred_check_branch
      %53 = sbr.rel (0) target = $region37
    $region36: #{time_embedding_fwd.1} parent=1 // pred_region
      %54 = dma.done [#allocation6], 1024
    $region37: #{time_embedding_fwd.1} parent=1 // pred_fallthru
      _
    %v56 = vld [vmem:[%s0] sm:$0x3]
    %v57 = vld [vmem:[%s1] sm:$0x1]
    %59 = vset.pattern.permute.xlu0 0
    %60 = vperm.xlu0 %59, %v56
    %v61 = vpop.permute.xlu0 %60
    %v64 = vlaneseq
    %v65 = vshrl.u32 %v64, 7
    %v66 = vsub.s32 0, %v65
    %v67 = vrot.slane %v57, %v66
    %v69 = vmul.f32 %v61, %v67
    %v70 = vand.u32 2147483647, %v69
    %vm71 = vcmp.le.f32.partialorder %v70, 0.7853982
    %vm72 = vcmp.lt.s32.totalorder %v69, 0
    %v73 = vand.u32 %v69, 2139095040
    %v74 = vshrl.u32 %v73, 23
    %v75 = vsub.s32 %v74, 127
    %v76 = vand.u32 2147483647, %v69
    %v77 = vand.u32 %v76, 8388607
    %v78 = vor.u32 %v77, 8388608
    %v79 = vsub.s32 0, %v78
    %v80 = vadd.s32 %v75, 1
    %vm81 = vcmp.gt.s32.totalorder %v80, 0
    %v82 = vsel %vm81, %v80, 0
    %v83 = vshrl.u32 %v82, 5
    %v84 = vand.u32 %v82, 31
    %v85 = vsub.s32 32, %v84
    %v86 = vshrl.u32 683565275, %v85
    %v87 = vshll.u32 683565275, %v84
    %v88 = vshrl.u32 2475754826, %v85
    %v89 = vor.u32 %v87, %v88
    %v90 = vshll.u32 2475754826, %v84
    %v91 = vshrl.u32 2131351028, %v85
    %v92 = vor.u32 %v90, %v91
    %v93 = vshll.u32 2131351028, %v84
    %v94 = vshrl.u32 2102212464, %v85
    %v95 = vor.u32 %v93, %v94
    %v96 = vshll.u32 2102212464, %v84
    %v97 = vshrl.u32 920167782, %v85
    %v98 = vor.u32 %v96, %v97
    %v99 = vshll.u32 920167782, %v84
    %v100 = vshrl.u32 1326507024, %v85
    %v101 = vor.u32 %v99, %v100
    %vm102 = vcmp.lt.s32.totalorder %v83, 1
    %vm103 = vcmp.lt.s32.totalorder %v83, 2
    %vm104 = vcmp.lt.s32.totalorder %v83, 3
    %vm105 = vcmp.lt.s32.totalorder %v83, 4
    %v106 = vsel %vm102, %v86, %v89
    %v107 = vsel %vm105, %v95, 2102212464
    %v108 = vsel %vm104, %v92, %v107
    %v109 = vsel %vm103, %v106, %v108
    %v110 = vsel %vm102, %v89, %v92
    %v111 = vsel %vm105, %v98, 920167782
    %v112 = vsel %vm104, %v95, %v111
    %v113 = vsel %vm103, %v110, %v112
    %v114 = vsel %vm102, %v92, %v95
    %v115 = vsel %vm105, %v101, 1326507024
    %v116 = vsel %vm104, %v98, %v115
    %v117 = vsel %vm103, %v114, %v116
    %v118 = vshll.u32 %v78, 8
    %v119 = vmul.u32.u64.compose %v118, %v117
    %v120 = vextract.low.u32 %v119
    %v121 = vextract.high.u32 %v119
    %v122 = vmul.u32.u64.compose %v118, %v113
    %v123 = vextract.low.u32 %v122
    %v124 = vextract.high.u32 %v122
    %v125 = vmul.u32 %v118, %v109
    %v126 = vadd.s32 %v121, %v123
    %vm127 = vc.u32 %v121, %v123
    %v128 = vadd.s32 %v124, 1
    %v129 = vsel %vm127, %v128, %v124
    %v130 = vadd.s32 %v125, %v129
    %v131 = vadd.s32 %v130, 536870912
    %v132 = vshrl.u32 %v131, 30
    %v133 = vshll.u32 %v132, 30
    %v134 = vsub.s32 %v130, %v133
    %vm135 = vcmp.lt.s32.totalorder %v134, 0
    %v136 = vsub.s32 0, %v134
    %v137 = vsel %vm135, %v136, %v134
    %v138 = vclz %v137
    %v139 = vsub.s32 %v138, 2
    %vm140 = vcmp.gt.s32.totalorder 0, %v139
    %v141 = vsel %vm140, 0, %v139
    %v142 = vsub.s32 32, %v141
    %v143 = vshll.u32 %v134, %v141
    %v144 = vshrl.u32 %v126, %v142
    %v145 = vor.u32 %v143, %v144
    %v146 = vsub.s32 4294967266, %v141
    %v147 = vadd.s32 %v146, 127
    %v148 = vshll.u32 %v147, 23
    %v149 = vor.u32 4788187, %v148
    %v150 = vand.u32 2147483647, %v149
    %v152 = vcvt.s32.f32 %v145
    %v153 = vmul.f32 %v152, %v150
    %v154 = vxor.u32 %v153, 2147483648
    %v155 = vsel %vm72, %v154, %v153
    %v156 = vsub.s32 4, %v132
    %v157 = vsel %vm72, %v156, %v132
    %v158 = vsel %vm71, %v69, %v155
    %v159 = vsel %vm71, 0, %v157
    %v160 = vcosq.f32.pop %v158
    %v161 = vsinq.f32.pop %v158
    %vm162 = vweird.f32 %v69
    %v163 = vand.u32 %v159, 3
    %vm164 = vcmp.lt.s32.totalorder %v163, 2
    %vm165 = vcmp.eq.s32.totalorder %v163, 0
    %v166 = vxor.u32 %v161, 2147483648
    %v167 = vsel %vm165, %v160, %v166
    %vm168 = vcmp.eq.s32.totalorder %v163, 2
    %v169 = vxor.u32 %v160, 2147483648
    %v170 = vsel %vm168, %v169, %v161
    %v171 = vsel %vm164, %v167, %v170
    %v172 = vsel %vm162, nan, %v171
    %v173 = vpack.c.bf16 %v172, %v172
    %v174 = vand.u32 2147483647, %v69
    %vm175 = vcmp.le.f32.partialorder %v174, 0.7853982
    %vm176 = vcmp.lt.s32.totalorder %v69, 0
    %v177 = vand.u32 %v69, 2139095040
    %v178 = vshrl.u32 %v177, 23
    %v179 = vsub.s32 %v178, 127
    %v180 = vand.u32 2147483647, %v69
    %v181 = vand.u32 %v180, 8388607
    %v182 = vor.u32 %v181, 8388608
    %v183 = vsub.s32 0, %v182
    %v184 = vadd.s32 %v179, 1
    %vm185 = vcmp.gt.s32.totalorder %v184, 0
    %v186 = vsel %vm185, %v184, 0
    %v187 = vshrl.u32 %v186, 5
    %v188 = vand.u32 %v186, 31
    %v189 = vsub.s32 32, %v188
    %v190 = vshrl.u32 683565275, %v189
    %v191 = vshll.u32 683565275, %v188
    %v192 = vshrl.u32 2475754826, %v189
    %v193 = vor.u32 %v191, %v192
    %v194 = vshll.u32 2475754826, %v188
    %v195 = vshrl.u32 2131351028, %v189
    %v196 = vor.u32 %v194, %v195
    %v197 = vshll.u32 2131351028, %v188
    %v198 = vshrl.u32 2102212464, %v189
    %v199 = vor.u32 %v197, %v198
    %v200 = vshll.u32 2102212464, %v188
    %v201 = vshrl.u32 920167782, %v189
    %v202 = vor.u32 %v200, %v201
    %v203 = vshll.u32 920167782, %v188
    %v204 = vshrl.u32 1326507024, %v189
    %v205 = vor.u32 %v203, %v204
    %vm206 = vcmp.lt.s32.totalorder %v187, 1
    %vm207 = vcmp.lt.s32.totalorder %v187, 2
    %vm208 = vcmp.lt.s32.totalorder %v187, 3
    %vm209 = vcmp.lt.s32.totalorder %v187, 4
    %v210 = vsel %vm206, %v190, %v193
    %v211 = vsel %vm209, %v199, 2102212464
    %v212 = vsel %vm208, %v196, %v211
    %v213 = vsel %vm207, %v210, %v212
    %v214 = vsel %vm206, %v193, %v196
    %v215 = vsel %vm209, %v202, 920167782
    %v216 = vsel %vm208, %v199, %v215
    %v217 = vsel %vm207, %v214, %v216
    %v218 = vsel %vm206, %v196, %v199
    %v219 = vsel %vm209, %v205, 1326507024
    %v220 = vsel %vm208, %v202, %v219
    %v221 = vsel %vm207, %v218, %v220
    %v222 = vshll.u32 %v182, 8
    %v223 = vmul.u32.u64.compose %v222, %v221
    %v224 = vextract.low.u32 %v223
    %v225 = vextract.high.u32 %v223
    %v226 = vmul.u32.u64.compose %v222, %v217
    %v227 = vextract.low.u32 %v226
    %v228 = vextract.high.u32 %v226
    %v229 = vmul.u32 %v222, %v213
    %v230 = vadd.s32 %v225, %v227
    %vm231 = vc.u32 %v225, %v227
    %v232 = vadd.s32 %v228, 1
    %v233 = vsel %vm231, %v232, %v228
    %v234 = vadd.s32 %v229, %v233
    %v235 = vadd.s32 %v234, 536870912
    %v236 = vshrl.u32 %v235, 30
    %v237 = vshll.u32 %v236, 30
    %v238 = vsub.s32 %v234, %v237
    %vm239 = vcmp.lt.s32.totalorder %v238, 0
    %v240 = vsub.s32 0, %v238
    %v241 = vsel %vm239, %v240, %v238
    %v242 = vclz %v241
    %v243 = vsub.s32 %v242, 2
    %vm244 = vcmp.gt.s32.totalorder 0, %v243
    %v245 = vsel %vm244, 0, %v243
    %v246 = vsub.s32 32, %v245
    %v247 = vshll.u32 %v238, %v245
    %v248 = vshrl.u32 %v230, %v246
    %v249 = vor.u32 %v247, %v248
    %v250 = vsub.s32 4294967266, %v245
    %v251 = vadd.s32 %v250, 127
    %v252 = vshll.u32 %v251, 23
    %v253 = vor.u32 4788187, %v252
    %v254 = vand.u32 2147483647, %v253
    %v256 = vcvt.s32.f32 %v249
    %v257 = vmul.f32 %v256, %v254
    %v258 = vxor.u32 %v257, 2147483648
    %v259 = vsel %vm176, %v258, %v257
    %v260 = vsub.s32 4, %v236
    %v261 = vsel %vm176, %v260, %v236
    %v262 = vsel %vm175, %v69, %v259
    %v263 = vsel %vm175, 0, %v261
    %v264 = vcosq.f32.pop %v262
    %v265 = vsinq.f32.pop %v262
    %vm266 = vweird.f32 %v69
    %v267 = vadd.s32 %v263, 3
    %v268 = vand.u32 %v267, 3
    %vm269 = vcmp.lt.s32.totalorder %v268, 2
    %vm270 = vcmp.eq.s32.totalorder %v268, 0
    %v271 = vxor.u32 %v265, 2147483648
    %v272 = vsel %vm270, %v264, %v271
    %vm273 = vcmp.eq.s32.totalorder %v268, 2
    %v274 = vxor.u32 %v264, 2147483648
    %v275 = vsel %vm273, %v274, %v265
    %v276 = vsel %vm269, %v272, %v275
    %v277 = vsel %vm266, nan, %v276
    %v278 = vpack.c.bf16 %v277, %v277
    %v279 = vld [vmem:[%s2] sm:$0xf]
    %v280 = vld [vmem:[%s2 + $0x4] sm:$0xf]
    %v281 = vld [vmem:[#allocation2] sm:$0xf]
    %v282 = vld [vmem:[#allocation2 + $0x4] sm:$0xf]
    %v285 = vunpack.c.l.b16 %v281
    %v286 = vunpack.c.l.b16 %v282
    %v287 = vpack.c.b16 %v286, %v285
    %vm289 = vcmask 130048
    %v291 = vsel %vm289, %v278, 0
    %293 = vmatprep.subr.bf16.mxu0 0
    %294 = vmatpush1.bf16.msra.mxu0 0
    %295 = vmatprep.subr.bf16.mxu0 0
    %296 = vmatpush1.bf16.msra.mxu0 0
    %297 = vmatprep.subr.bf16.mxu0 0
    %298 = vmatpush1.bf16.msra.mxu0 0
    %299 = vmatprep.subr.bf16.mxu0 0
    %300 = vmatpush1.bf16.msra.mxu0 0
    %301 = vmatprep.subr.bf16.mxu0 0
    %302 = vmatpush1.bf16.msra.mxu0 0
    %303 = vmatprep.subr.bf16.mxu0 0
    %304 = vmatpush1.bf16.msra.mxu0 0
    %305 = vmatprep.subr.bf16.mxu0 0
    %306 = vmatpush1.bf16.msra.mxu0 0
    %307 = vmatprep.subr.bf16.mxu0 0
    %308 = vmatpush1.bf16.msra.mxu0 %v287
    %309 = vmatprep.subr.bf16.mxu0 0
    %310 = vmatpush2.bf16.msra.mxu0 0
    %311 = vmatprep.subr.bf16.mxu0 0
    %312 = vmatpush2.bf16.msra.mxu0 0
    %313 = vmatprep.subr.bf16.mxu0 0
    %314 = vmatpush2.bf16.msra.mxu0 0
    %315 = vmatprep.subr.bf16.mxu0 0
    %316 = vmatpush2.bf16.msra.mxu0 0
    %317 = vmatprep.subr.bf16.mxu0 0
    %318 = vmatpush2.bf16.msra.mxu0 0
    %319 = vmatprep.subr.bf16.mxu0 0
    %320 = vmatpush2.bf16.msra.mxu0 0
    %321 = vmatprep.subr.bf16.mxu0 0
    %322 = vmatpush2.bf16.msra.mxu0 0
    %323 = vmatprep.subr.bf16.mxu0 0
    %324 = vmatpush2.bf16.msra.mxu0 0
    %325 = vmatprep.mubr.bf16.mxu0 0
    %326 = vmatmul.mubr.bf16.gmra.mxu0 %v291
    %v327 = vpop.f32.mrf.mxu0
    %v328 = vadd.f32 0.0, %v327
    %v329 = vpop.f32.mrf.mxu0
    %v330 = vpop.f32.mrf.mxu0
    %v331 = vpop.f32.mrf.mxu0
    %332 = vdwg.mxu0
    %v335 = vunpack.c.l.b16 %v279
    %v336 = vunpack.c.l.b16 %v280
    %v337 = vpack.c.b16 %v336, %v335
    %v340 = vsel %vm289, %v173, 0
    %342 = vmatprep.subr.bf16.mxu0 0
    %343 = vmatpush1.bf16.msra.mxu0 0
    %344 = vmatprep.subr.bf16.mxu0 0
    %345 = vmatpush1.bf16.msra.mxu0 0
    %346 = vmatprep.subr.bf16.mxu0 0
    %347 = vmatpush1.bf16.msra.mxu0 0
    %348 = vmatprep.subr.bf16.mxu0 0
    %349 = vmatpush1.bf16.msra.mxu0 0
    %350 = vmatprep.subr.bf16.mxu0 0
    %351 = vmatpush1.bf16.msra.mxu0 0
    %352 = vmatprep.subr.bf16.mxu0 0
    %353 = vmatpush1.bf16.msra.mxu0 0
    %354 = vmatprep.subr.bf16.mxu0 0
    %355 = vmatpush1.bf16.msra.mxu0 0
    %356 = vmatprep.subr.bf16.mxu0 0
    %357 = vmatpush1.bf16.msra.mxu0 %v337
    %358 = vmatprep.subr.bf16.mxu0 0
    %359 = vmatpush2.bf16.msra.mxu0 0
    %360 = vmatprep.subr.bf16.mxu0 0
    %361 = vmatpush2.bf16.msra.mxu0 0
    %362 = vmatprep.subr.bf16.mxu0 0
    %363 = vmatpush2.bf16.msra.mxu0 0
    %364 = vmatprep.subr.bf16.mxu0 0
    %365 = vmatpush2.bf16.msra.mxu0 0
    %366 = vmatprep.subr.bf16.mxu0 0
    %367 = vmatpush2.bf16.msra.mxu0 0
    %368 = vmatprep.subr.bf16.mxu0 0
    %369 = vmatpush2.bf16.msra.mxu0 0
    %370 = vmatprep.subr.bf16.mxu0 0
    %371 = vmatpush2.bf16.msra.mxu0 0
    %372 = vmatprep.subr.bf16.mxu0 0
    %373 = vmatpush2.bf16.msra.mxu0 0
    %374 = vmatprep.mubr.bf16.mxu0 0
    %375 = vmatmul.mubr.bf16.gmra.mxu0 %v340
    %v376 = vpop.f32.mrf.mxu0
    %v377 = vadd.f32 %v328, %v376
    %v378 = vpop.f32.mrf.mxu0
    %v379 = vpop.f32.mrf.mxu0
    %v380 = vpop.f32.mrf.mxu0
    %381 = vdwg.mxu0
    %v382 = vld [vmem:[%s4] sm:$0x1]
    %v384 = vlaneseq
    %v385 = vshrl.u32 %v384, 7
    %v386 = vsub.s32 0, %v385
    %v387 = vrot.slane %v382, %v386
    %v389 = vadd.f32 %v377, %v387
    %v390 = vxor.u32 %v389, 2147483648
    %v391 = vmul.f32 %v390, 1.442695
    %v392 = vpow.pop %v391
    %v393 = vadd.f32 %v392, 1.0
    %v394 = vrcp.pop %v393
    %v395 = vmul.f32 1.0, %v394
    %v396 = vmul.f32 %v389, %v395
    %v397 = vpack.c.bf16 %v396, %v396
    %v398 = vld [vmem:[#allocation5] sm:$0xf]
    %v399 = vld [vmem:[#allocation5 + $0x4] sm:$0xf]
    %v400 = vld [vmem:[#allocation5 + $0x8] sm:$0xf]
    %v401 = vld [vmem:[#allocation5 + $0xc] sm:$0xf]
    %v402 = vld [vmem:[#allocation5 + $0x10] sm:$0xf]
    %v403 = vld [vmem:[#allocation5 + $0x14] sm:$0xf]
    %v404 = vld [vmem:[#allocation5 + $0x18] sm:$0xf]
    %v405 = vld [vmem:[#allocation5 + $0x1c] sm:$0xf]
    %v406 = vld [vmem:[#allocation5 + $0x20] sm:$0xf]
    %v407 = vld [vmem:[#allocation5 + $0x24] sm:$0xf]
    %v408 = vld [vmem:[#allocation5 + $0x28] sm:$0xf]
    %v409 = vld [vmem:[#allocation5 + $0x2c] sm:$0xf]
    %v410 = vld [vmem:[#allocation5 + $0x30] sm:$0xf]
    %v411 = vld [vmem:[#allocation5 + $0x34] sm:$0xf]
    %v412 = vld [vmem:[#allocation5 + $0x38] sm:$0xf]
    %v413 = vld [vmem:[#allocation5 + $0x3c] sm:$0xf]
    %v414 = vld [vmem:[%s6] sm:$0x1]
    %v416 = vlaneseq
    %v417 = vshrl.u32 %v416, 7
    %v418 = vsub.s32 0, %v417
    %v419 = vrot.slane %v414, %v418
    %v437 = vunpack.c.l.b16 %v398
    %v438 = vunpack.c.l.b16 %v399
    %v439 = vunpack.c.l.b16 %v400
    %v440 = vunpack.c.l.b16 %v401
    %v441 = vunpack.c.l.b16 %v402
    %v442 = vunpack.c.l.b16 %v403
    %v443 = vunpack.c.l.b16 %v404
    %v444 = vunpack.c.l.b16 %v405
    %v445 = vunpack.c.l.b16 %v406
    %v446 = vunpack.c.l.b16 %v407
    %v447 = vunpack.c.l.b16 %v408
    %v448 = vunpack.c.l.b16 %v409
    %v449 = vunpack.c.l.b16 %v410
    %v450 = vunpack.c.l.b16 %v411
    %v451 = vunpack.c.l.b16 %v412
    %v452 = vunpack.c.l.b16 %v413
    %v453 = vpack.c.b16 %v438, %v437
    %v454 = vpack.c.b16 %v440, %v439
    %v455 = vpack.c.b16 %v442, %v441
    %v456 = vpack.c.b16 %v444, %v443
    %v457 = vpack.c.b16 %v446, %v445
    %v458 = vpack.c.b16 %v448, %v447
    %v459 = vpack.c.b16 %v450, %v449
    %v460 = vpack.c.b16 %v452, %v451
    %469 = vmatprep.subr.bf16.mxu0 0
    %470 = vmatpush1.bf16.msra.mxu0 %v460
    %471 = vmatprep.subr.bf16.mxu0 0
    %472 = vmatpush1.bf16.msra.mxu0 %v459
    %473 = vmatprep.subr.bf16.mxu0 0
    %474 = vmatpush1.bf16.msra.mxu0 %v458
    %475 = vmatprep.subr.bf16.mxu0 0
    %476 = vmatpush1.bf16.msra.mxu0 %v457
    %477 = vmatprep.subr.bf16.mxu0 0
    %478 = vmatpush1.bf16.msra.mxu0 %v456
    %479 = vmatprep.subr.bf16.mxu0 0
    %480 = vmatpush1.bf16.msra.mxu0 %v455
    %481 = vmatprep.subr.bf16.mxu0 0
    %482 = vmatpush1.bf16.msra.mxu0 %v454
    %483 = vmatprep.subr.bf16.mxu0 0
    %484 = vmatpush1.bf16.msra.mxu0 %v453
    %485 = vmatprep.subr.bf16.mxu0 0
    %486 = vmatpush2.bf16.msra.mxu0 0
    %487 = vmatprep.subr.bf16.mxu0 0
    %488 = vmatpush2.bf16.msra.mxu0 0
    %489 = vmatprep.subr.bf16.mxu0 0
    %490 = vmatpush2.bf16.msra.mxu0 0
    %491 = vmatprep.subr.bf16.mxu0 0
    %492 = vmatpush2.bf16.msra.mxu0 0
    %493 = vmatprep.subr.bf16.mxu0 0
    %494 = vmatpush2.bf16.msra.mxu0 0
    %495 = vmatprep.subr.bf16.mxu0 0
    %496 = vmatpush2.bf16.msra.mxu0 0
    %497 = vmatprep.subr.bf16.mxu0 0
    %498 = vmatpush2.bf16.msra.mxu0 0
    %499 = vmatprep.subr.bf16.mxu0 0
    %500 = vmatpush2.bf16.msra.mxu0 0
    %501 = vmatprep.mubr.bf16.mxu0 0
    %502 = vmatmul.mubr.bf16.gmra.mxu0 %v397
    %v503 = vpop.f32.mrf.mxu0
    %v504 = vadd.f32 %v419, %v503
    %v505 = vpop.f32.mrf.mxu0
    %v506 = vpop.f32.mrf.mxu0
    %v507 = vpop.f32.mrf.mxu0
    %508 = vdwg.mxu0
    %509 = vst [vmem:[#allocation7] sm:$0x3] %v504
    // Predicated region
    $region38: #{time_embedding_fwd.1} parent=1 // pred_check
      _
    $region39: #{time_embedding_fwd.1} parent=1 // pred_check_branch
      %511 = sbr.rel (0) target = $region41
    $region40: #{time_embedding_fwd.1} parent=1 // pred_region
      %s513 = ssub.s32 32, 32
      %514 = vsyncadd [#allocation4], %s513
      %s516 = sshll.u32 [#allocation7], 4
      %s517 = int_to_ptr.vmem [resolvable:$true] %s516
      %519 = dma.vmem_to_hbm [thread:$0]  %s517, 32, %s7, [#allocation4]
    $region41: #{time_embedding_fwd.1} parent=1 // pred_fallthru
      _
    // Predicated region
    $region42: #{time_embedding_fwd.1} parent=1 // pred_check
      _
    $region43: #{time_embedding_fwd.1} parent=1 // pred_check_branch
      %521 = sbr.rel (0) target = $region45
    $region44: #{time_embedding_fwd.1} parent=1 // pred_region
      %522 = dma.done [#allocation4], 32
    $region45: #{time_embedding_fwd.1} parent=1 // pred_fallthru
      _
    %523 = vsyncpa [#allocation3], 1
    %524 = vsyncpa [#allocation6], 1
    %525 = vsyncpa [#allocation4], 1

</llo_original>
